<compile_context>
chip_gen: v7x
topology: tpu7x:2x2x1
jax: 0.10.0
libtpu: 0.0.40
codegen_flags: <defaults>
</compile_context>

<pallas_src>
import functools
import inspect
import math

import jax
import jax.numpy as jnp
from jax import lax
from jax.experimental import pallas as pl
from jax.experimental.pallas import tpu as pltpu


def _layernorm(h, w, b, eps=1e-5):
    mu = jnp.mean(h, axis=-1, keepdims=True)
    var = jnp.mean((h - mu) ** 2, axis=-1, keepdims=True)
    return (h - mu) * lax.rsqrt(var + eps) * w + b


# --------------------------------------------------------------------------
# Kernel 1: LN1 + fused QKV projection for one (batch, seq-tile) block.
# Writes a single fused (1, 3, t1, C) bf16 block (q / k / v stacked on axis 1).
# --------------------------------------------------------------------------
def ln_qkv_kernel(x_ref, ln1w_ref, ln1b_ref, wqkv_ref, bqkv_ref, qkv_ref, *, C):
    x = x_ref[0]                                      # (t1, C) f32
    h = _layernorm(x, ln1w_ref[0], ln1b_ref[0])       # f32
    qkv = jnp.dot(h.astype(jnp.bfloat16), wqkv_ref[...],
                  preferred_element_type=jnp.float32) + bqkv_ref[0]
    qkv_ref[0, 0] = qkv[:, 0 * C:1 * C].astype(qkv_ref.dtype)   # q (pre-scaled)
    qkv_ref[0, 1] = qkv[:, 1 * C:2 * C].astype(qkv_ref.dtype)   # k
    qkv_ref[0, 2] = qkv[:, 2 * C:3 * C].astype(qkv_ref.dtype)   # v


# --------------------------------------------------------------------------
# Kernel 2: flash-style causal attention + out-proj + residual + LN2 + MLP +
# residual for one (batch, query-tile) block, accumulated over KV tiles
# (innermost grid axis).  Only KV tiles with kt <= qt do any work.
# --------------------------------------------------------------------------
def attn_mlp_kernel(x_ref, q_ref, k_ref, v_ref,
                    wproj_ref, bproj_ref, ln2w_ref, ln2b_ref,
                    wfc_ref, bfc_ref, wp2_ref, bp2_ref,
                    o_ref, m_scr, l_scr, acc_scr, *, C, H, TQ, TK):
    D = C // H
    qt = pl.program_id(1)
    kt = pl.program_id(2)

    @pl.when(kt == 0)
    def _init():
        m_scr[...] = jnp.full_like(m_scr, -jnp.inf)
        l_scr[...] = jnp.zeros_like(l_scr)
        acc_scr[...] = jnp.zeros_like(acc_scr)

    # Online-softmax accumulation over one (TQ, TK) KV tile.  Tiles entirely above
    # the causal diagonal are skipped (no compute; their DMA is also elided because
    # the K/V index_map clamps them to the diagonal tile -> same block index).
    @pl.when(kt <= qt)
    def _accumulate():
        q = q_ref[0, 0]     # (TQ, C) bf16, q pre-scaled by 1/sqrt(D)
        k = k_ref[0, 0]     # (TK, C) bf16
        v = v_ref[0, 0]     # (TK, C) bf16
        row = lax.broadcasted_iota(jnp.int32, (TQ, TK), 0) + qt * TQ
        col = lax.broadcasted_iota(jnp.int32, (TQ, TK), 1) + kt * TK
        neg = jnp.where(col <= row, 0.0, -1e30).astype(jnp.float32)

        # Static per-head loop: each head's state is flushed to VMEM scratch
        # immediately, so only one (TQ, TK) score/prob tensor is live at a time
        # (no H-way concat, no H-way live ranges).
        for h in range(H):
            sl = slice(h * D, (h + 1) * D)
            # (TQ, D) x (TK, D) contracting D -> lane-dense (TQ, TK) scores.
            s = lax.dot_general(q[:, sl], k[:, sl], (((1,), (1,)), ((), ())),
                                preferred_element_type=jnp.float32) + neg
            m_prev = m_scr[h]                                     # (TQ, 1)
            m_new = jnp.maximum(m_prev, jnp.max(s, axis=-1, keepdims=True))
            alpha = jnp.exp(m_prev - m_new)                       # (TQ, 1)
            p = jnp.exp(s - m_new)                                # (TQ, TK), <= 1
            l_scr[h] = alpha * l_scr[h] + jnp.sum(p, axis=-1, keepdims=True)
            # Unnormalized PV (normalization happens post-PV on (TQ, D)).
            acc_scr[h] = alpha * acc_scr[h] + jnp.dot(
                p.astype(jnp.bfloat16), v[:, sl],
                preferred_element_type=jnp.float32)               # (TQ, D)
            m_scr[h] = m_new

    # Epilogue: runs exactly once per query tile, on its last useful KV tile.
    @pl.when(kt == qt)
    def _finalize():
        x = x_ref[0]                                              # (TQ, C) f32
        # Per-head: normalize the (TQ, D) accumulator and accumulate it directly
        # into the output projection (no head concatenation, output stays width C).
        y = jnp.zeros((TQ, C), jnp.float32)
        for h in range(H):
            inv = pl.reciprocal(l_scr[h], approx=True)            # (TQ, 1)
            ph = (acc_scr[h] * inv).astype(jnp.bfloat16)          # (TQ, D)
            y = y + jnp.dot(ph, wproj_ref[h * D:(h + 1) * D, :],
                            preferred_element_type=jnp.float32)
        x1 = x + y + bproj_ref[0]                                 # residual 1

        h2 = _layernorm(x1, ln2w_ref[0], ln2b_ref[0])
        # TODO(synk): for C >= ~1536 on v7x, stream W_fc / W_p2 through an inner
        # pipeline tiled over the 4C axis instead of keeping both VMEM-resident.
        z = jnp.dot(h2.astype(jnp.bfloat16), wfc_ref[...],
                    preferred_element_type=jnp.float32) + bfc_ref[0]
        z = jax.nn.gelu(z, approximate=False)   # exact erf = nn.GELU() default
        z = jnp.dot(z.astype(jnp.bfloat16), wp2_ref[...],
                    preferred_element_type=jnp.float32) + bp2_ref[0]
        o_ref[0] = (x1 + z).astype(o_ref.dtype)                   # residual 2


# --------------------------------------------------------------------------
# Capability probe / VMEM budgeting
# --------------------------------------------------------------------------
@functools.lru_cache(maxsize=None)
def _single_buffer_mode():
    """Explicit capability probe for pl.Buffered(1) (single-buffered invariant
    weights).  Probes a tiny throwaway kernel, so a failure here can only mean
    'feature unsupported' -- it cannot mask bugs in the real kernels."""
    if not hasattr(pl, "Buffered"):
        return None
    try:
        if "pipeline_mode" not in inspect.signature(pl.BlockSpec).parameters:
            return None
    except (TypeError, ValueError):
        return None
    mode = pl.Buffered(1)

    def _probe(w_ref, o_ref):
        o_ref[...] = w_ref[...] * 2.0

    try:
        fn = pl.pallas_call(
            _probe,
            out_shape=jax.ShapeDtypeStruct((8, 128), jnp.float32),
            grid_spec=pltpu.PrefetchScalarGridSpec(
                num_scalar_prefetch=0, grid=(2,),
                in_specs=[pl.BlockSpec((8, 128), lambda i: (0, 0),
                                       pipeline_mode=mode)],
                out_specs=pl.BlockSpec((8, 128), lambda i: (0, 0))),
        )
        jax.jit(fn).lower(jnp.zeros((8, 128), jnp.float32)).compile()
    except Exception:
        return None
    return mode


def _vmem_limit_bytes():
    cap = 64 * 1024 * 1024                      # conservative fallback (v7x per-TC)
    try:
        info = pltpu.get_tpu_info()
        cap = int(getattr(info, "vmem_capacity_bytes", cap) or cap)
    except Exception:
        pass
    # ~3/4 of physical: ~96 MiB on v5e/v6e (128 MiB), ~48 MiB on v7x (64 MiB).
    return min(cap * 3 // 4, 112 * 1024 * 1024)


# --------------------------------------------------------------------------
# Wrapper
# --------------------------------------------------------------------------
def gpt_block(x, params, n_head, tq=256, t1=512):
    """GPT Block forward (inference).

    tq: query/KV tile size for the attention+MLP kernel (kernel 2).
    t1: sequence tile for the LN1+QKV kernel (kernel 1) -- decoupled from tq so the
        cheap projection kernel can use larger tiles on 128-MiB-VMEM chips.
    """
    B, T, C = x.shape
    assert C % n_head == 0
    D = C // n_head
    tq = min(tq, T)
    t1 = min(t1, T)
    assert T % tq == 0 and T % t1 == 0, "T must be divisible by the tile sizes"
    nq = T // tq

    # Fold 1/sqrt(D) into the q columns of the QKV projection (O(C*3C) once,
    # removes an O(H*T*T) VPU pass in-kernel).  Cast matmul weights to bf16.
    scale = jnp.concatenate(
        [jnp.full((1, C), 1.0 / math.sqrt(D), jnp.float32),
         jnp.ones((1, 2 * C), jnp.float32)], axis=-1)
    w_qkv = (params['w_qkv'] * scale).astype(jnp.bfloat16)
    b_qkv = params['b_qkv'] * scale                       # bias stays f32
    w_proj = params['w_proj'].astype(jnp.bfloat16)
    w_fc = params['w_fc'].astype(jnp.bfloat16)
    w_p2 = params['w_p2'].astype(jnp.bfloat16)

    wmode = _single_buffer_mode()
    vmem_limit = _vmem_limit_bytes()

    def const_spec(shape):
        nd = len(shape)
        idx = lambda *_: (0,) * nd
        if wmode is None:
            return pl.BlockSpec(shape, idx)
        return pl.BlockSpec(shape, idx, pipeline_mode=wmode)

    # ---- kernel 1: LN1 + fused QKV projection -> (B, 3, T, C) bf16 ----
    qkv = pl.pallas_call(
        functools.partial(ln_qkv_kernel, C=C),
        out_shape=jax.ShapeDtypeStruct((B, 3, T, C), jnp.bfloat16),
        grid_spec=pltpu.PrefetchScalarGridSpec(
            num_scalar_prefetch=0,
            grid=(B, T // t1),
            in_specs=[
                pl.BlockSpec((1, t1, C), lambda b, t: (b, t, 0)),   # x tile
                const_spec((1, C)), const_spec((1, C)),             # ln1 w/b
                const_spec((C, 3 * C)),                             # W_qkv (bf16)
                const_spec((1, 3 * C)),                             # b_qkv (f32)
            ],
            out_specs=pl.BlockSpec((1, 3, t1, C), lambda b, t: (b, 0, t, 0)),
        ),
        compiler_params=pltpu.CompilerParams(
            dimension_semantics=("parallel", "parallel"),
            vmem_limit_bytes=vmem_limit),
    )(x, params['ln1_w'], params['ln1_b'], w_qkv, b_qkv)

    # ---- kernel 2: flash attention + proj + residual + LN2 + MLP + residual ----
    # Grid = (batch, query tile, KV tile).  KV tiles above the causal diagonal are
    # clamped to the diagonal tile (no extra DMA) and their compute is gated off.
    # TODO(synk): flatten (qt, kt) into a 1-D lower-triangular grid via scalar
    # prefetch to also remove the ~0.35us/step overhead of the skipped grid steps.
    def row_map(b, qi, ki):
        return (b, qi, 0)

    def q_map(b, qi, ki):
        return (b, 0, qi, 0)

    def k_map(b, qi, ki):
        return (b, 1, jnp.minimum(ki, qi), 0)

    def v_map(b, qi, ki):
        return (b, 2, jnp.minimum(ki, qi), 0)

    out = pl.pallas_call(
        functools.partial(attn_mlp_kernel, C=C, H=n_head, TQ=tq, TK=tq),
        out_shape=jax.ShapeDtypeStruct((B, T, C), x.dtype),
        grid_spec=pltpu.PrefetchScalarGridSpec(
            num_scalar_prefetch=0,
            grid=(B, nq, nq),
            in_specs=[
                pl.BlockSpec((1, tq, C), row_map),                  # x (residual)
                pl.BlockSpec((1, 1, tq, C), q_map),                 # q tile
                pl.BlockSpec((1, 1, tq, C), k_map),                 # k tile
                pl.BlockSpec((1, 1, tq, C), v_map),                 # v tile
                const_spec((C, C)), const_spec((1, C)),             # W_proj, b_proj
                const_spec((1, C)), const_spec((1, C)),             # ln2 w/b
                const_spec((C, 4 * C)), const_spec((1, 4 * C)),     # W_fc, b_fc
                const_spec((4 * C, C)), const_spec((1, C)),         # W_p2, b_p2
            ],
            out_specs=pl.BlockSpec((1, tq, C), row_map),
            scratch_shapes=[
                pltpu.VMEM((n_head, tq, 1), jnp.float32),           # running max m
                pltpu.VMEM((n_head, tq, 1), jnp.float32),           # running sum l
                pltpu.VMEM((n_head, tq, D), jnp.float32),           # per-head PV acc
            ],
        ),
        compiler_params=pltpu.CompilerParams(
            # Only the batch axis is sharded across TensorCores (v7x), keeping the
            # qt/kt loops sequential per core so the K/V revisit-skip is preserved.
            dimension_semantics=("parallel", "arbitrary", "arbitrary"),
            vmem_limit_bytes=vmem_limit),
    )(x, qkv, qkv, qkv,
      w_proj, params['b_proj'], params['ln2_w'], params['ln2_b'],
      w_fc, params['b_fc'], w_p2, params['b_p2'])
    return out


# --------------------------------------------------------------------------
# Params & pure-JAX reference
# --------------------------------------------------------------------------
def init_params(key, n_embd):
    C = n_embd
    ks = jax.random.split(key, 4)
    std = 0.02

    def w(k, shape):
        # PyTorch Linear weight is (out, in); we store (in, out) = its transpose.
        return jax.random.normal(k, shape, jnp.float32) * std

    return {
        'ln1_w': jnp.ones((1, C), jnp.float32),
        'ln1_b': jnp.zeros((1, C), jnp.float32),
        'w_qkv': w(ks[0], (C, 3 * C)),
        'b_qkv': jnp.zeros((1, 3 * C), jnp.float32),
        'w_proj': w(ks[1], (C, C)),
        'b_proj': jnp.zeros((1, C), jnp.float32),
        'ln2_w': jnp.ones((1, C), jnp.float32),
        'ln2_b': jnp.zeros((1, C), jnp.float32),
        'w_fc': w(ks[2], (C, 4 * C)),
        'b_fc': jnp.zeros((1, 4 * C), jnp.float32),
        'w_p2': w(ks[3], (4 * C, C)),
        'b_p2': jnp.zeros((1, C), jnp.float32),
    }


def gpt_block_ref(x, p, n_head):
    """Pure-JAX f32 reference for correctness checking."""
    B, T, C = x.shape
    D = C // n_head

    def ln(h, w, b):
        mu = jnp.mean(h, -1, keepdims=True)
        var = jnp.mean((h - mu) ** 2, -1, keepdims=True)
        return (h - mu) * lax.rsqrt(var + 1e-5) * w[0] + b[0]

    h = ln(x, p['ln1_w'], p['ln1_b'])
    qkv = h @ p['w_qkv'] + p['b_qkv'][0]
    q, k, v = jnp.split(qkv, 3, axis=-1)
    q = q.reshape(B, T, n_head, D).transpose(0, 2, 1, 3)
    k = k.reshape(B, T, n_head, D).transpose(0, 2, 1, 3)
    v = v.reshape(B, T, n_head, D).transpose(0, 2, 1, 3)
    s = jnp.einsum('bhtd,bhsd->bhts', q, k) / math.sqrt(D)
    mask = jnp.tril(jnp.ones((T, T), bool))
    s = jnp.where(mask, s, -1e30)
    a = jax.nn.softmax(s, axis=-1)
    y = jnp.einsum('bhts,bhsd->bhtd', a, v).transpose(0, 2, 1, 3).reshape(B, T, C)
    y = y @ p['w_proj'] + p['b_proj'][0]
    x = x + y
    h = ln(x, p['ln2_w'], p['ln2_b'])
    z = jax.nn.gelu(h @ p['w_fc'] + p['b_fc'][0], approximate=False)
    z = z @ p['w_p2'] + p['b_p2'][0]
    return x + z


if __name__ == "__main__":
    B, T, C, H = 2, 8, 32, 4
    key = jax.random.PRNGKey(0)
    kx, kp = jax.random.split(key)
    x = jax.random.normal(kx, (B, T, C), jnp.float32)
    params = init_params(kp, C)

    out = gpt_block(x, params, n_head=H)
    out = jax.block_until_ready(out)

    ref = gpt_block_ref(x, params, H)
    assert out.shape == (B, T, C)
    err = jnp.max(jnp.abs(out - ref))
    # bf16 matmul inputs + approximate reciprocal + folded q-scale => looser
    # tolerance than pure f32.  (Verify at production T before relying on it.)
    assert jnp.allclose(out, ref, atol=2e-2, rtol=2e-2), f"max err {err}"

    print("KERNEL_OK")
</pallas_src>

<mosaic_0001>
module attributes {stable_mosaic.version = 11 : i64} {
  func.func @ln_qkv_kernel(%arg0: i32, %arg1: i32, %arg2: memref<1x8x32xf32, #tpu.memory_space<vmem>>, %arg3: memref<1x32xf32, #tpu.memory_space<vmem>>, %arg4: memref<1x32xf32, #tpu.memory_space<vmem>>, %arg5: memref<32x96xbf16, #tpu.memory_space<vmem>>, %arg6: memref<1x96xf32, #tpu.memory_space<vmem>>, %arg7: memref<1x3x8x32xbf16, #tpu.memory_space<vmem>>) attributes {dimension_semantics = [#tpu.dimension_semantics<parallel>, #tpu.dimension_semantics<parallel>], iteration_bounds = array<i64: 2, 1>, scalar_prefetch = 0 : i64, scratch_operands = 0 : i64, tpu.core_type = #tpu.core_type<tc>, window_params = [{transform_indices = @transform_0, window_bounds = array<i64: 1, 8, 32>}, {pipeline_mode = #tpu.pipeline_mode<synchronous>, transform_indices = @transform_1, window_bounds = array<i64: 1, 32>}, {pipeline_mode = #tpu.pipeline_mode<synchronous>, transform_indices = @transform_2, window_bounds = array<i64: 1, 32>}, {pipeline_mode = #tpu.pipeline_mode<synchronous>, transform_indices = @transform_3, window_bounds = array<i64: 32, 96>}, {pipeline_mode = #tpu.pipeline_mode<synchronous>, transform_indices = @transform_4, window_bounds = array<i64: 1, 96>}, {transform_indices = @transform_5, window_bounds = array<i64: 1, 3, 8, 32>}]} {
    %c0 = arith.constant 0 : index
    %c0_0 = arith.constant 0 : index
    %c0_1 = arith.constant 0 : index
    %0 = vector.load %arg2[%c0, %c0_0, %c0_1] : memref<1x8x32xf32, #tpu.memory_space<vmem>>, vector<1x8x32xf32>
    %1 = vector.shape_cast %0 : vector<1x8x32xf32> to vector<8x32xf32>
    %c0_2 = arith.constant 0 : index
    %c0_3 = arith.constant 0 : index
    %2 = vector.load %arg3[%c0_2, %c0_3] : memref<1x32xf32, #tpu.memory_space<vmem>>, vector<1x32xf32>
    %3 = vector.shape_cast %2 : vector<1x32xf32> to vector<32xf32>
    %c0_4 = arith.constant 0 : index
    %c0_5 = arith.constant 0 : index
    %4 = vector.load %arg4[%c0_4, %c0_5] : memref<1x32xf32, #tpu.memory_space<vmem>>, vector<1x32xf32>
    %5 = vector.shape_cast %4 : vector<1x32xf32> to vector<32xf32>
    %cst = arith.constant dense<0.000000e+00> : vector<8xf32>
    %6 = vector.multi_reduction <add>, %1, %cst [1] : vector<8x32xf32> to vector<8xf32>
    %7 = vector.shape_cast %6 : vector<8xf32> to vector<8x1xf32>
    %cst_6 = arith.constant 3.200000e+01 : f32
    %8 = vector.broadcast %cst_6 : f32 to vector<8x1xf32>
    %9 = arith.divf %7, %8 : vector<8x1xf32>
    %10 = vector.broadcast %9 : vector<8x1xf32> to vector<8x32xf32>
    %11 = arith.subf %1, %10 : vector<8x32xf32>
    %12 = arith.mulf %11, %11 : vector<8x32xf32>
    %cst_7 = arith.constant dense<0.000000e+00> : vector<8xf32>
    %13 = vector.multi_reduction <add>, %12, %cst_7 [1] : vector<8x32xf32> to vector<8xf32>
    %14 = vector.shape_cast %13 : vector<8xf32> to vector<8x1xf32>
    %cst_8 = arith.constant 3.200000e+01 : f32
    %15 = vector.broadcast %cst_8 : f32 to vector<8x1xf32>
    %16 = arith.divf %14, %15 : vector<8x1xf32>
    %17 = vector.broadcast %9 : vector<8x1xf32> to vector<8x32xf32>
    %18 = arith.subf %1, %17 : vector<8x32xf32>
    %cst_9 = arith.constant 9.99999974E-6 : f32
    %19 = vector.broadcast %cst_9 : f32 to vector<8x1xf32>
    %20 = arith.addf %16, %19 : vector<8x1xf32>
    %21 = math.rsqrt %20 : vector<8x1xf32>
    %22 = vector.broadcast %21 : vector<8x1xf32> to vector<8x32xf32>
    %23 = arith.mulf %18, %22 : vector<8x32xf32>
    %24 = vector.shape_cast %3 : vector<32xf32> to vector<1x32xf32>
    %25 = vector.broadcast %24 : vector<1x32xf32> to vector<8x32xf32>
    %26 = arith.mulf %23, %25 : vector<8x32xf32>
    %27 = vector.shape_cast %5 : vector<32xf32> to vector<1x32xf32>
    %28 = vector.broadcast %27 : vector<1x32xf32> to vector<8x32xf32>
    %29 = arith.addf %26, %28 : vector<8x32xf32>
    %30 = arith.truncf %29 : vector<8x32xf32> to vector<8x32xbf16>
    %c0_10 = arith.constant 0 : index
    %c0_11 = arith.constant 0 : index
    %31 = vector.load %arg5[%c0_10, %c0_11] : memref<32x96xbf16, #tpu.memory_space<vmem>>, vector<32x96xbf16>
    %cst_12 = arith.constant dense<0.000000e+00> : vector<8x96xf32>
    %32 = tpu.matmul %30, %31, %cst_12 {dimension_numbers = #tpu.dot_dimension_numbers<[1], [0], [0], [1], [0, 0, 1, 1], [], []>} : vector<8x32xbf16>, vector<32x96xbf16>, vector<8x96xf32> -> vector<8x96xf32>
    %c0_13 = arith.constant 0 : index
    %c0_14 = arith.constant 0 : index
    %33 = vector.load %arg6[%c0_13, %c0_14] : memref<1x96xf32, #tpu.memory_space<vmem>>, vector<1x96xf32>
    %34 = vector.shape_cast %33 : vector<1x96xf32> to vector<96xf32>
    %35 = vector.shape_cast %34 : vector<96xf32> to vector<1x96xf32>
    %36 = vector.broadcast %35 : vector<1x96xf32> to vector<8x96xf32>
    %37 = arith.addf %32, %36 : vector<8x96xf32>
    %38 = vector.extract_strided_slice %37 {offsets = [0, 0], sizes = [8, 32], strides = [1, 1]} : vector<8x96xf32> to vector<8x32xf32>
    %39 = arith.truncf %38 : vector<8x32xf32> to vector<8x32xbf16>
    %c0_15 = arith.constant 0 : index
    %c0_16 = arith.constant 0 : index
    %c0_17 = arith.constant 0 : index
    %c0_18 = arith.constant 0 : index
    %40 = vector.load %arg7[%c0_15, %c0_16, %c0_17, %c0_18] : memref<1x3x8x32xbf16, #tpu.memory_space<vmem>>, vector<1x1x8x32xbf16>
    %41 = vector.shape_cast %40 : vector<1x1x8x32xbf16> to vector<8x32xbf16>
    %42 = vector.shape_cast %39 : vector<8x32xbf16> to vector<1x1x8x32xbf16>
    tpu.vector_store %arg7[%c0_15, %c0_16, %c0_17, %c0_18], %42 {strides = array<i32>} : memref<1x3x8x32xbf16, #tpu.memory_space<vmem>>, vector<1x1x8x32xbf16>,
    %43 = vector.extract_strided_slice %37 {offsets = [0, 32], sizes = [8, 32], strides = [1, 1]} : vector<8x96xf32> to vector<8x32xf32>
    %44 = arith.truncf %43 : vector<8x32xf32> to vector<8x32xbf16>
    %c0_19 = arith.constant 0 : index
    %c1 = arith.constant 1 : index
    %c0_20 = arith.constant 0 : index
    %c0_21 = arith.constant 0 : index
    %45 = vector.load %arg7[%c0_19, %c1, %c0_20, %c0_21] : memref<1x3x8x32xbf16, #tpu.memory_space<vmem>>, vector<1x1x8x32xbf16>
    %46 = vector.shape_cast %45 : vector<1x1x8x32xbf16> to vector<8x32xbf16>
    %47 = vector.shape_cast %44 : vector<8x32xbf16> to vector<1x1x8x32xbf16>
    tpu.vector_store %arg7[%c0_19, %c1, %c0_20, %c0_21], %47 {strides = array<i32>} : memref<1x3x8x32xbf16, #tpu.memory_space<vmem>>, vector<1x1x8x32xbf16>,
    %48 = vector.extract_strided_slice %37 {offsets = [0, 64], sizes = [8, 32], strides = [1, 1]} : vector<8x96xf32> to vector<8x32xf32>
    %49 = arith.truncf %48 : vector<8x32xf32> to vector<8x32xbf16>
    %c0_22 = arith.constant 0 : index
    %c2 = arith.constant 2 : index
    %c0_23 = arith.constant 0 : index
    %c0_24 = arith.constant 0 : index
    %50 = vector.load %arg7[%c0_22, %c2, %c0_23, %c0_24] : memref<1x3x8x32xbf16, #tpu.memory_space<vmem>>, vector<1x1x8x32xbf16>
    %51 = vector.shape_cast %50 : vector<1x1x8x32xbf16> to vector<8x32xbf16>
    %52 = vector.shape_cast %49 : vector<8x32xbf16> to vector<1x1x8x32xbf16>
    tpu.vector_store %arg7[%c0_22, %c2, %c0_23, %c0_24], %52 {strides = array<i32>} : memref<1x3x8x32xbf16, #tpu.memory_space<vmem>>, vector<1x1x8x32xbf16>,
    return
  }
  func.func @transform_0(%arg0: i32, %arg1: i32) -> (i32, i32, i32) {
    %c0_i32 = arith.constant 0 : i32
    %c0_i32_0 = arith.constant 0 : i32
    return %arg0, %arg1, %c0_i32 : i32, i32, i32
  }
  func.func @transform_1(%arg0: i32, %arg1: i32) -> (i32, i32) {
    %c0_i32 = arith.constant 0 : i32
    %c0_i32_0 = arith.constant 0 : i32
    %c0_i32_1 = arith.constant 0 : i32
    return %c0_i32, %c0_i32_0 : i32, i32
  }
  func.func @transform_2(%arg0: i32, %arg1: i32) -> (i32, i32) {
    %c0_i32 = arith.constant 0 : i32
    %c0_i32_0 = arith.constant 0 : i32
    %c0_i32_1 = arith.constant 0 : i32
    return %c0_i32, %c0_i32_0 : i32, i32
  }
  func.func @transform_3(%arg0: i32, %arg1: i32) -> (i32, i32) {
    %c0_i32 = arith.constant 0 : i32
    %c0_i32_0 = arith.constant 0 : i32
    %c0_i32_1 = arith.constant 0 : i32
    return %c0_i32, %c0_i32_0 : i32, i32
  }
  func.func @transform_4(%arg0: i32, %arg1: i32) -> (i32, i32) {
    %c0_i32 = arith.constant 0 : i32
    %c0_i32_0 = arith.constant 0 : i32
    %c0_i32_1 = arith.constant 0 : i32
    return %c0_i32, %c0_i32_0 : i32, i32
  }
  func.func @transform_5(%arg0: i32, %arg1: i32) -> (i32, i32, i32, i32) {
    %c0_i32 = arith.constant 0 : i32
    %c0_i32_0 = arith.constant 0 : i32
    %c0_i32_1 = arith.constant 0 : i32
    return %arg0, %c0_i32, %arg1, %c0_i32_0 : i32, i32, i32, i32
  }
}

</mosaic_0001>

<llo_original>
// kernel: tpu_custom_call.1
$region0: #{tpu_custom_call.1}
  #allocation0 [shape = 'u32[]', space=smem, size = 0x4, offset = 0x4, fixed_abs, tag = 'smem constant byte address 0x4 - core index']
  #allocation1 [shape = 'u32[144,128]{1,0:T(1,128)}', space=vmem, size = 0x12000, scoped, tag = 'internal scratch']
  %s0 = inlined_call_operand.hbm [shape: f32[2,8,32], index: 0, kind: input, shape index: {}]
  %s1 = inlined_call_operand.vmem [shape: f32[1,32], index: 1, kind: input, shape index: {}]
  %s2 = inlined_call_operand.vmem [shape: f32[1,32], index: 2, kind: input, shape index: {}]
  %s3 = inlined_call_operand.hbm [shape: bf16[32,96], index: 3, kind: input, shape index: {}]
  %s4 = inlined_call_operand.vmem [shape: f32[1,96], index: 4, kind: input, shape index: {}]
  %s5 = inlined_call_operand.hbm [shape: bf16[2,3,8,32], index: 5, kind: output, shape index: {}]
  %s6 = sld [smem:[#allocation0]]
  $region61: #{tpu_custom_call.1} parent=0
    _
  %s8 = ssub.s32 1, %s6
  %s9 = scalar_select 0, %s8, %s6
  $region1: #{tpu_custom_call.1} parent=0
    #allocation2 [shape = 'u8[8192]{0}', space=vmem, size = 0x2000, scoped, tag = 'input window, operand 0']
    #allocation3 [shape = 's32[2]{0}', space=sflag, size = 0x8, scoped, tag = 'scoped memory for tpu_custom_call.1']
    #allocation4 [shape = 's32[2]{0}', space=sflag, size = 0x8, scoped, tag = 'scoped memory for tpu_custom_call.1']
    #allocation5 [shape = 'u8[8192]{0}', space=vmem, size = 0x2000, scoped, tag = 'input window, operand 3, single buffered']
    #allocation6 [shape = 's32[1]{0}', space=sflag, size = 0x4, scoped, tag = 'scoped memory for tpu_custom_call.1']
    #allocation7 [shape = 'u8[12288]{0}', space=vmem, size = 0x3000, scoped, tag = 'output window, operand 0']
    %10 = vsyncpa [#allocation3], 0
    %s11 = scalar_lea.sflag [#allocation3], 1
    %12 = vsyncpa %s11, 0
    %13 = vsyncpa [#allocation6], 0
    %14 = vsyncpa [#allocation4], 0
    %s15 = scalar_lea.sflag [#allocation4], 1
    %16 = vsyncpa %s15, 0
    loop: start=0, step=1, limit=4
    $region2: #{tpu_custom_call.1} parent=1 // loop_pre_header
      _
    $region3: #{tpu_custom_call.1} parent=1 // loop_header
      %s18 = sphi 0, %s22
      %p19 = scmp.ge.s32.totalorder %s18, 4
      %s25 = sphi 0, %s37
      %s26 = sphi 0, %s33
      %s27 = sphi 0, %s25
      %s28 = sphi 0, %s26
      %s29 = sphi 0, %s27
      %s30 = sphi 0, %s28
      %s42 = sphi 0, %s44
      %s45 = sphi 0, %s42
      %s46 = sphi 0, %s45
      %s62 = sphi 0, %s46
      %s66 = sphi 0, %s66
      %s68 = sphi 0, %s66
      %s69 = sphi 0, %s68
      %s83 = sphi 0, %s69
      %s87 = sphi 0, %s87
      %s89 = sphi 0, %s87
      %s90 = sphi 0, %s89
      %s104 = sphi 0, %s90
      %s108 = sphi 0, %s108
      %s110 = sphi 0, %s108
      %s111 = sphi 0, %s110
      %s125 = sphi 0, %s111
      %s129 = sphi 0, %s129
      %s131 = sphi 0, %s129
      %s132 = sphi 0, %s131
      %s146 = sphi 0, %s132
      %s154 = sphi 0, %s156
      %s157 = sphi 0, %s154
      %s158 = sphi 0, %s157
      %s174 = sphi 0, %s158
    $region4: #{tpu_custom_call.1} parent=1 // loop_header_branch
      %21 = sbr.rel (%p19) target = $region8
    $region5: #{tpu_custom_call.1} parent=1 // loop_body
      %s23 = ssub.s32 %s18, 1
      %s24 = ssub.s32 %s18, 2
      %s31 = sadd.s32 1, %s26
      %p32 = scmp.ge.s32.totalorder %s31, 1
      %s33 = scalar_select %p32, 0, %s31
      %s34 = sadd.s32 1, %s25
      %s35 = scalar_select %p32, %s34, %s25
      %p36 = scmp.ge.s32.totalorder %s35, 2
      %s37 = scalar_select %p36, 0, %s35
      %s38 = ssub.s32 %s25, %s37
      %s39 = ssub.s32 %s26, %s33
      %s40 = sor.u32 %s38, %s39
      %p41 = scmp.eq.s32.totalorder %s40, 0
      %s43 = sadd.s32 %s42, 1
      %s44 = scalar_select %p41, %s42, %s43
      %p47 = pneg %p41
      %p48 = scmp.eq.s32.totalorder %s18, 1
      %p49 = por %p47, %p48
      %p50 = scmp.ne.s32.totalorder %s42, %s45
      %p51 = scmp.eq.s32.totalorder %s18, 0
      %p52 = por %p50, %p51
      %p53 = scmp.ne.s32.totalorder %s42, %s45
      %p54 = scmp.eq.s32.totalorder %s23, 1
      %p55 = por %p53, %p54
      %p56 = scmp.ne.s32.totalorder %s45, %s46
      %p57 = scmp.eq.s32.totalorder %s23, 0
      %p58 = por %p56, %p57
      %p59 = scmp.ne.s32.totalorder %s45, %s46
      %p60 = scmp.eq.s32.totalorder %s24, 1
      %p61 = por %p59, %p60
      %p63 = scmp.ne.s32.totalorder %s46, %s62
      %p64 = scmp.eq.s32.totalorder %s24, 0
      %p65 = por %p63, %p64
      %s67 = sadd.s32 %s66, 1
      %p70 = scmp.eq.s32.totalorder %s18, 1
      %p71 = scmp.ne.s32.totalorder %s66, %s68
      %p72 = scmp.eq.s32.totalorder %s18, 0
      %p73 = por %p71, %p72
      %p74 = scmp.ne.s32.totalorder %s66, %s68
      %p75 = scmp.eq.s32.totalorder %s23, 1
      %p76 = por %p74, %p75
      %p77 = scmp.ne.s32.totalorder %s68, %s69
      %p78 = scmp.eq.s32.totalorder %s23, 0
      %p79 = por %p77, %p78
      %p80 = scmp.ne.s32.totalorder %s68, %s69
      %p81 = scmp.eq.s32.totalorder %s24, 1
      %p82 = por %p80, %p81
      %p84 = scmp.ne.s32.totalorder %s69, %s83
      %p85 = scmp.eq.s32.totalorder %s24, 0
      %p86 = por %p84, %p85
      %s88 = sadd.s32 %s87, 1
      %p91 = scmp.eq.s32.totalorder %s18, 1
      %p92 = scmp.ne.s32.totalorder %s87, %s89
      %p93 = scmp.eq.s32.totalorder %s18, 0
      %p94 = por %p92, %p93
      %p95 = scmp.ne.s32.totalorder %s87, %s89
      %p96 = scmp.eq.s32.totalorder %s23, 1
      %p97 = por %p95, %p96
      %p98 = scmp.ne.s32.totalorder %s89, %s90
      %p99 = scmp.eq.s32.totalorder %s23, 0
      %p100 = por %p98, %p99
      %p101 = scmp.ne.s32.totalorder %s89, %s90
      %p102 = scmp.eq.s32.totalorder %s24, 1
      %p103 = por %p101, %p102
      %p105 = scmp.ne.s32.totalorder %s90, %s104
      %p106 = scmp.eq.s32.totalorder %s24, 0
      %p107 = por %p105, %p106
      %s109 = sadd.s32 %s108, 1
      %p112 = scmp.eq.s32.totalorder %s18, 1
      %p113 = scmp.ne.s32.totalorder %s108, %s110
      %p114 = scmp.eq.s32.totalorder %s18, 0
      %p115 = por %p113, %p114
      %p116 = scmp.ne.s32.totalorder %s108, %s110
      %p117 = scmp.eq.s32.totalorder %s23, 1
      %p118 = por %p116, %p117
      %p119 = scmp.ne.s32.totalorder %s110, %s111
      %p120 = scmp.eq.s32.totalorder %s23, 0
      %p121 = por %p119, %p120
      %p122 = scmp.ne.s32.totalorder %s110, %s111
      %p123 = scmp.eq.s32.totalorder %s24, 1
      %p124 = por %p122, %p123
      %p126 = scmp.ne.s32.totalorder %s111, %s125
      %p127 = scmp.eq.s32.totalorder %s24, 0
      %p128 = por %p126, %p127
      %s130 = sadd.s32 %s129, 1
      %p133 = scmp.eq.s32.totalorder %s18, 1
      %p134 = scmp.ne.s32.totalorder %s129, %s131
      %p135 = scmp.eq.s32.totalorder %s18, 0
      %p136 = por %p134, %p135
      %p137 = scmp.ne.s32.totalorder %s129, %s131
      %p138 = scmp.eq.s32.totalorder %s23, 1
      %p139 = por %p137, %p138
      %p140 = scmp.ne.s32.totalorder %s131, %s132
      %p141 = scmp.eq.s32.totalorder %s23, 0
      %p142 = por %p140, %p141
      %p143 = scmp.ne.s32.totalorder %s131, %s132
      %p144 = scmp.eq.s32.totalorder %s24, 1
      %p145 = por %p143, %p144
      %p147 = scmp.ne.s32.totalorder %s132, %s146
      %p148 = scmp.eq.s32.totalorder %s24, 0
      %p149 = por %p147, %p148
      %s150 = ssub.s32 %s25, %s37
      %s151 = ssub.s32 %s26, %s33
      %s152 = sor.u32 %s150, %s151
      %p153 = scmp.eq.s32.totalorder %s152, 0
      %s155 = sadd.s32 %s154, 1
      %s156 = scalar_select %p153, %s154, %s155
      %p159 = pneg %p153
      %p160 = scmp.eq.s32.totalorder %s18, 1
      %p161 = por %p159, %p160
      %p162 = scmp.ne.s32.totalorder %s154, %s157
      %p163 = scmp.eq.s32.totalorder %s18, 0
      %p164 = por %p162, %p163
      %p165 = scmp.ne.s32.totalorder %s154, %s157
      %p166 = scmp.eq.s32.totalorder %s23, 1
      %p167 = por %p165, %p166
      %p168 = scmp.ne.s32.totalorder %s157, %s158
      %p169 = scmp.eq.s32.totalorder %s23, 0
      %p170 = por %p168, %p169
      %p171 = scmp.ne.s32.totalorder %s157, %s158
      %p172 = scmp.eq.s32.totalorder %s24, 1
      %p173 = por %p171, %p172
      %p175 = scmp.ne.s32.totalorder %s158, %s174
      %p176 = scmp.eq.s32.totalorder %s24, 0
      %p177 = por %p175, %p176
      %p178 = scmp.le.s32.totalorder 1, %s18
      %p179 = scmp.lt.s32.totalorder %s18, 3
      %p180 = pnand %p178, %p179
      %p181 = pneg %p180
      // Predicated region
      $region9: #{tpu_custom_call.1} parent=5 // pred_check
        _
      $region10: #{tpu_custom_call.1} parent=5 // pred_check_branch
        %183 = sbr.rel (%p180) target = $region12
      $region11: #{tpu_custom_call.1} parent=5 // pred_region
        %s184 = ssub.s32 %s18, 1
        // Predicated region
        $region13: #{tpu_custom_call.1} parent=11 // pred_check
          %p185 = pneg %p79
        $region14: #{tpu_custom_call.1} parent=11 // pred_check_branch
          %187 = sbr.rel (%p185) target = $region16
        $region15: #{tpu_custom_call.1} parent=11 // pred_region
          _
        $region16: #{tpu_custom_call.1} parent=11 // pred_fallthru
          _
        // Predicated region
        $region17: #{tpu_custom_call.1} parent=11 // pred_check
          %p188 = pneg %p100
        $region18: #{tpu_custom_call.1} parent=11 // pred_check_branch
          %190 = sbr.rel (%p188) target = $region20
        $region19: #{tpu_custom_call.1} parent=11 // pred_region
          _
        $region20: #{tpu_custom_call.1} parent=11 // pred_fallthru
          _
        // Predicated region
        $region21: #{tpu_custom_call.1} parent=11 // pred_check
          %p191 = pneg %p121
        $region22: #{tpu_custom_call.1} parent=11 // pred_check_branch
          %193 = sbr.rel (%p191) target = $region24
        $region23: #{tpu_custom_call.1} parent=11 // pred_region
          %s195 = ssub.s32 256, 256
          %196 = vsyncadd [#allocation6], %s195
          %s197 = sshll.u32 [#allocation5], 4
          %s198 = int_to_ptr.vmem [resolvable:$true] %s197
          %203 = dma.hbm_to_vmem [thread:$0]  %s3, 256, %s198, [#allocation6], 64, 64, 4
        $region24: #{tpu_custom_call.1} parent=11 // pred_fallthru
          _
        // Predicated region
        $region25: #{tpu_custom_call.1} parent=11 // pred_check
          %p204 = pneg %p142
        $region26: #{tpu_custom_call.1} parent=11 // pred_check_branch
          %206 = sbr.rel (%p204) target = $region28
        $region27: #{tpu_custom_call.1} parent=11 // pred_region
          _
        $region28: #{tpu_custom_call.1} parent=11 // pred_fallthru
          _
      $region12: #{tpu_custom_call.1} parent=5 // pred_fallthru
        _
      %p207 = scmp.lt.s32.totalorder %s18, 2
      // Predicated region
      $region29: #{tpu_custom_call.1} parent=5 // pred_check
        %p208 = pneg %p207
      $region30: #{tpu_custom_call.1} parent=5 // pred_check_branch
        %210 = sbr.rel (%p208) target = $region32
      $region31: #{tpu_custom_call.1} parent=5 // pred_region
        // Predicated region
        $region33: #{tpu_custom_call.1} parent=31 // pred_check
          %p211 = pneg %p52
        $region34: #{tpu_custom_call.1} parent=31 // pred_check_branch
          %213 = sbr.rel (%p211) target = $region36
        $region35: #{tpu_custom_call.1} parent=31 // pred_region
          %s214 = sand.u32 %s42, 1
          %s215 = scalar_lea.sflag [#allocation3], %s214
          %s216 = sand.u32 %s42, 1
          %s217 = smul.addr %s216, 8
          %s218 = scalar_lea.vmem [#allocation2], %s217
          %s220 = ssub.s32 128, 128
          %221 = vsyncadd %s215, %s220
          %s222 = sadd.s32 %s26, %s25
          %s223 = smul.addr %s222, 128
          %s224 = scalar_lea.hbm %s0, %s223
          %s226 = sshll.u32 %s218, 4
          %s227 = int_to_ptr.vmem [resolvable:$true] %s226
          %229 = dma.hbm_to_vmem [thread:$0]  %s224, 128, %s227, %s215
        $region36: #{tpu_custom_call.1} parent=31 // pred_fallthru
          _
      $region32: #{tpu_custom_call.1} parent=5 // pred_fallthru
        _
      %p230 = scmp.le.s32.totalorder 1, %s18
      %p231 = scmp.lt.s32.totalorder %s18, 3
      %p232 = pnand %p230, %p231
      %p233 = pneg %p232
      // Predicated region
      $region37: #{tpu_custom_call.1} parent=5 // pred_check
        _
      $region38: #{tpu_custom_call.1} parent=5 // pred_check_branch
        %235 = sbr.rel (%p232) target = $region40
      $region39: #{tpu_custom_call.1} parent=5 // pred_region
        %s236 = ssub.s32 %s18, 1
        %s237 = sand.u32 %s45, 1
        %s238 = scalar_lea.sflag [#allocation3], %s237
        %s239 = sand.u32 %s45, 1
        %s240 = smul.addr %s239, 8
        %s241 = scalar_lea.vmem [#allocation2], %s240
        // Predicated region
        $region41: #{tpu_custom_call.1} parent=39 // pred_check
          %p242 = pneg %p58
        $region42: #{tpu_custom_call.1} parent=39 // pred_check_branch
          %244 = sbr.rel (%p242) target = $region44
        $region43: #{tpu_custom_call.1} parent=39 // pred_region
          %245 = dma.done %s238, 128
        $region44: #{tpu_custom_call.1} parent=39 // pred_fallthru
          _
        // Predicated region
        $region45: #{tpu_custom_call.1} parent=39 // pred_check
          %p246 = pneg %p121
        $region46: #{tpu_custom_call.1} parent=39 // pred_check_branch
          %248 = sbr.rel (%p246) target = $region48
        $region47: #{tpu_custom_call.1} parent=39 // pred_region
          %249 = dma.done [#allocation6], 256
        $region48: #{tpu_custom_call.1} parent=39 // pred_fallthru
          _
        %s250 = sand.u32 %s45, 1
        %s251 = scalar_lea.sflag [#allocation3], %s250
        %s252 = sand.u32 %s45, 1
        %s253 = smul.addr %s252, 8
        %s254 = scalar_lea.vmem [#allocation2], %s253
        %p255 = pneg %p58
        %p256 = pneg %p55
        %p257 = pneg %p79
        %p258 = pneg %p76
        %p259 = pneg %p100
        %p260 = pneg %p97
        %p261 = pneg %p121
        %p262 = pneg %p118
        %p263 = pneg %p142
        %p264 = pneg %p139
        %p265 = pneg %p170
        %p266 = pneg %p167
        %s267 = sand.u32 %s157, 1
        %s268 = scalar_lea.sflag [#allocation4], %s267
        %s269 = sand.u32 %s157, 1
        %s270 = smul.addr %s269, 12
        %s271 = scalar_lea.vmem [#allocation7], %s270
        %v273 = vld [vmem:[%s241] sm:$0xff]
        %v274 = vld [vmem:[%s1] sm:$0x1]
        %v275 = vld [vmem:[%s2] sm:$0x1]
        %vm276 = vcmask 261120
        %v277 = vsel %vm276, %v273, 0.0
        %278 = vadd.xlane.f32.xlu0 %v277
        %v279 = vpop.xlane.xlu0 %278
        %v280 = vrcp.pop 32.0
        %v281 = vmul.f32 %v279, %v280
        %v282 = vsub.f32 %v273, %v281
        %v283 = vmul.f32 %v282, %v282
        %v284 = vsel %vm276, %v283, 0.0
        %285 = vadd.xlane.f32.xlu0 %v284
        %v286 = vpop.xlane.xlu0 %285
        %v287 = vmul.f32 %v286, %v280
        %v288 = vadd.f32 %v287, 1e-05
        %v289 = vrsqrt.pop %v288
        %v290 = vmul.f32 %v282, %v289
        %v292 = vlaneseq
        %v293 = vshrl.u32 %v292, 7
        %v294 = vsub.s32 0, %v293
        %v295 = vrot.slane %v274, %v294
        %v297 = vmul.f32 %v290, %v295
        %v299 = vlaneseq
        %v300 = vshrl.u32 %v299, 7
        %v301 = vsub.s32 0, %v300
        %v302 = vrot.slane %v275, %v301
        %v304 = vadd.f32 %v297, %v302
        %v305 = vpack.c.bf16 %v304, %v304
        %v306 = vld [vmem:[#allocation5] sm:$0xf]
        %v307 = vld [vmem:[#allocation5 + $0x4] sm:$0xf]
        %v308 = vld [vmem:[#allocation5 + $0x8] sm:$0xf]
        %v309 = vld [vmem:[#allocation5 + $0xc] sm:$0xf]
        %v310 = vld [vmem:[%s4] sm:$0x1]
        %v312 = vlaneseq
        %v313 = vshrl.u32 %v312, 7
        %v314 = vsub.s32 0, %v313
        %v315 = vrot.slane %v310, %v314
        %v321 = vunpack.c.l.b16 %v306
        %v322 = vunpack.c.l.b16 %v307
        %v323 = vunpack.c.l.b16 %v308
        %v324 = vunpack.c.l.b16 %v309
        %v325 = vpack.c.b16 %v322, %v321
        %v326 = vpack.c.b16 %v324, %v323
        %v330 = vsel %vm276, %v305, 0
        %332 = vmatprep.subr.bf16.mxu0 0
        %333 = vmatpush1.bf16.msra.mxu0 %v325
        %334 = vmatprep.subr.bf16.mxu0 0
        %335 = vmatpush1.bf16.msra.mxu0 %v326
        %336 = vmatprep.subr.bf16.mxu0 0
        %337 = vmatpush1.bf16.msra.mxu0 0
        %338 = vmatprep.subr.bf16.mxu0 0
        %339 = vmatpush1.bf16.msra.mxu0 0
        %340 = vmatprep.subr.bf16.mxu0 0
        %341 = vmatpush1.bf16.msra.mxu0 0
        %342 = vmatprep.subr.bf16.mxu0 0
        %343 = vmatpush1.bf16.msra.mxu0 0
        %344 = vmatprep.subr.bf16.mxu0 0
        %345 = vmatpush1.bf16.msra.mxu0 0
        %346 = vmatprep.subr.bf16.mxu0 0
        %347 = vmatpush1.bf16.msra.mxu0 0
        %348 = vmatprep.subr.bf16.mxu0 0
        %349 = vmatpush1.bf16.msra.mxu0 0
        %350 = vmatprep.subr.bf16.mxu0 0
        %351 = vmatpush1.bf16.msra.mxu0 0
        %352 = vmatprep.subr.bf16.mxu0 0
        %353 = vmatpush1.bf16.msra.mxu0 0
        %354 = vmatprep.subr.bf16.mxu0 0
        %355 = vmatpush1.bf16.msra.mxu0 0
        %356 = vmatprep.subr.bf16.mxu0 0
        %357 = vmatpush1.bf16.msra.mxu0 0
        %358 = vmatprep.subr.bf16.mxu0 0
        %359 = vmatpush1.bf16.msra.mxu0 0
        %360 = vmatprep.subr.bf16.mxu0 0
        %361 = vmatpush1.bf16.msra.mxu0 0
        %362 = vmatprep.subr.bf16.mxu0 0
        %363 = vmatpush1.bf16.msra.mxu0 0
        %364 = vmatprep.mubr.bf16.mxu0 0
        %365 = vmatmul.mubr.bf16.gmra.mrb[0].mxu0 %v330
        %v366 = vpop.f32.mrb[0].mxu0
        %v367 = vadd.f32 %v315, %v366
        %v368 = vpop.f32.mrb[0].mxu0
        %v369 = vpop.f32.mrb[0].mxu0
        %v370 = vpop.f32.mrb[0].mxu0
        %371 = vdwg.mxu0
        %v372 = vpack.c.bf16 %v367, %v367
        %vm373 = vcmask 257024
        %374 = vst.msk [vmem:[%s271] sm:$0xf] %vm373, %v372
        %v376 = vunpack.c.l.b16 %v372
        %v377 = vpack.c.b16 %v376, %v376
        %378 = vrot.lane.b32.xlu0 %v377, 96
        %v379 = vpop.permute.xlu0 %378
        %s381 = scalar_lea.vmem %s271, 4 [#allocation7]
        %382 = vst.msk [vmem:[%s381] sm:$0xf] %vm373, %v379
        %383 = vrot.lane.b32.xlu0 %v377, 64
        %v384 = vpop.permute.xlu0 %383
        %s386 = scalar_lea.vmem %s271, 8 [#allocation7]
        %387 = vst.msk [vmem:[%s386] sm:$0xf] %vm373, %v384
        %s388 = sand.u32 %s157, 1
        %s389 = scalar_lea.sflag [#allocation4], %s388
        %s390 = sand.u32 %s157, 1
        %s391 = smul.addr %s390, 12
        %s392 = scalar_lea.vmem [#allocation7], %s391
        // Predicated region
        $region49: #{tpu_custom_call.1} parent=39 // pred_check
          %p393 = pneg %p167
        $region50: #{tpu_custom_call.1} parent=39 // pred_check_branch
          %395 = sbr.rel (%p393) target = $region52
        $region51: #{tpu_custom_call.1} parent=39 // pred_region
          %s397 = ssub.s32 192, 192
          %398 = vsyncadd %s389, %s397
          %s399 = smul.addr %s27, 3
          %s400 = sadd.s32 %s28, %s399
          %s401 = smul.addr %s400, 64
          %s402 = scalar_lea.hbm %s5, %s401
          %s403 = sshll.u32 %s392, 4
          %s404 = int_to_ptr.vmem [resolvable:$true] %s403
          %409 = dma.vmem_to_hbm [thread:$0]  %s404, 192, %s402, %s389, 64, 64, 4
        $region52: #{tpu_custom_call.1} parent=39 // pred_fallthru
          _
      $region40: #{tpu_custom_call.1} parent=5 // pred_fallthru
        _
      %p410 = scmp.le.s32.totalorder 2, %s18
      // Predicated region
      $region53: #{tpu_custom_call.1} parent=5 // pred_check
        %p411 = pneg %p410
      $region54: #{tpu_custom_call.1} parent=5 // pred_check_branch
        %413 = sbr.rel (%p411) target = $region56
      $region55: #{tpu_custom_call.1} parent=5 // pred_region
        %s414 = ssub.s32 %s18, 2
        // Predicated region
        $region57: #{tpu_custom_call.1} parent=55 // pred_check
          %p415 = pneg %p173
        $region58: #{tpu_custom_call.1} parent=55 // pred_check_branch
          %417 = sbr.rel (%p415) target = $region60
        $region59: #{tpu_custom_call.1} parent=55 // pred_region
          %s418 = sand.u32 %s158, 1
          %s419 = scalar_lea.sflag [#allocation4], %s418
          %s420 = sand.u32 %s158, 1
          %s421 = smul.addr %s420, 12
          %s422 = scalar_lea.vmem [#allocation7], %s421
          %423 = dma.done %s419, 192
        $region60: #{tpu_custom_call.1} parent=55 // pred_fallthru
          _
      $region56: #{tpu_custom_call.1} parent=5 // pred_fallthru
        _
    $region6: #{tpu_custom_call.1} parent=1 // loop_footer
      %s22 = sadd.s32 1, %s18
    $region7: #{tpu_custom_call.1} parent=1 // loop_footer_branch
      %17 = sbr.rel target = $region3
    $region8: #{tpu_custom_call.1} parent=1 // loop_exit
      _
    %424 = vsyncpa [#allocation3], 1
    %s425 = scalar_lea.sflag [#allocation3], 1
    %426 = vsyncpa %s425, 1
    %427 = vsyncpa [#allocation6], 1
    %428 = vsyncpa [#allocation4], 1
    %s429 = scalar_lea.sflag [#allocation4], 1
    %430 = vsyncpa %s429, 1

</llo_original>
